<compile_context>
chip_gen: v6e
topology: v6e:2x2x1
jax: 0.10.0
libtpu: 0.0.40
codegen_flags: <defaults>
</compile_context>

<pallas_src>
import functools

import jax
import jax.numpy as jnp
import numpy as np
from jax import lax
from jax.experimental import pallas as pl
from jax.experimental.pallas import tpu as pltpu

LANES = 128
ROW_ELEMS = 2 * LANES          # one interleaved row = 128 (x, y) flows
SUBLANES = 8
TILE_ROWS_MAX = 2048           # (2048, 256) f32 block = 2 MiB per operand
EPS = 1e-6
VMEM_LIMIT_BYTES = 32 * 1024 * 1024


def _cdiv(a, b):
    return -(-a // b)


def _round_up(a, b):
    return _cdiv(a, b) * b


def _plan(rows):
    """Static tiling plan over the [rows, 256] interleaved view."""
    n_splits = 2 if rows >= 2 * SUBLANES else 1      # feeds both v7x TensorCores
    per_split = _cdiv(rows, n_splits)
    steps0 = _cdiv(per_split, TILE_ROWS_MAX)
    tile_rows = min(TILE_ROWS_MAX, _round_up(_cdiv(per_split, steps0), SUBLANES))
    steps = _cdiv(per_split, tile_rows)              # recompute: no over-padding
    return n_splits, steps, tile_rows


def _make_kernel(steps, tile_rows, valid_rows, ragged):
    """Kernel producing per-lane partials: max |gt|^2, sum |d|, sum |gt|*|d|."""

    def kernel(pred_ref, gt_ref, maxsq_ref, s1_ref, s2_ref,
               maxsq_acc, s1_acc, s2_acc):
        step = pl.program_id(1)

        @pl.when(step == 0)
        def _():
            maxsq_acc[...] = jnp.zeros_like(maxsq_acc)
            s1_acc[...] = jnp.zeros_like(s1_acc)
            s2_acc[...] = jnp.zeros_like(s2_acc)

        g = gt_ref[...].astype(jnp.float32)      # [tile_rows, 256], x/y interleaved
        pr = pred_ref[...].astype(jnp.float32)   # native-dtype DMA, cast on-core

        d = jnp.abs(pr - g)                      # lane-wise |pred - gt|
        sq = g * g

        if ragged:
            # Only the final block can overrun the true row count; zero the
            # contributions of the out-of-bounds (garbage) rows.
            row_start = (pl.program_id(0) * steps + step) * tile_rows
            row_idx = lax.broadcasted_iota(jnp.int32, (tile_rows, ROW_ELEMS), 0)
            valid = row_idx < (valid_rows - row_start)
            d = jnp.where(valid, d, 0.0)
            sq = jnp.where(valid, sq, 0.0)

        # Pair-sum |gt|^2 across the interleaved (x, y) lanes: an even lane's
        # partner is the next lane, an odd lane's the previous one.  The two
        # rolls land in the otherwise-idle XLU slot; wrap-around lanes are never
        # selected, so the rotation wrap is irrelevant.
        lane = lax.broadcasted_iota(jnp.int32, (1, ROW_ELEMS), 1)
        is_even = (lane & 1) == 0
        partner = jnp.where(is_even,
                            pltpu.roll(sq, shift=ROW_ELEMS - 1, axis=1),  # sq[i+1]
                            pltpu.roll(sq, shift=1, axis=1))              # sq[i-1]
        magsq = sq + partner                     # |gt|^2 duplicated in both pair lanes
        mag = jnp.sqrt(magsq)                    # EUP slot

        # Pure-VPU lane-dense accumulation into VMEM-resident scratch.
        maxsq_acc[...] = jnp.maximum(maxsq_acc[...], magsq)
        s1_acc[...] = s1_acc[...] + d
        s2_acc[...] = s2_acc[...] + mag * d

        @pl.when(step == steps - 1)
        def _():
            # Fold to (1, 256) so only ~KBs are written back to HBM per split.
            maxsq_ref[0] = jnp.max(maxsq_acc[...], axis=0, keepdims=True)
            s1_ref[0] = jnp.sum(s1_acc[...], axis=0, keepdims=True)
            s2_ref[0] = jnp.sum(s2_acc[...], axis=0, keepdims=True)

    return kernel


@functools.partial(jax.jit, static_argnames=("beta",))
def flow_loss(pred_flow, gt_flow, beta=9.0):
    """Pallas implementation of FlowLoss.forward (weighted L1 flow loss)."""
    assert pred_flow.shape == gt_flow.shape
    n, c = pred_flow.shape
    assert c == 2
    # w_max = 1 + beta*M/(M+eps) requires weights monotone in the magnitude.
    assert beta >= 0.0, "flow_loss requires beta >= 0"

    elems = n * c
    rows_true = _cdiv(elems, ROW_ELEMS)
    n_splits, steps, tile_rows = _plan(rows_true)
    covered_rows = n_splits * steps * tile_rows

    if elems % ROW_ELEMS == 0 and tile_rows <= rows_true:
        # Pure bit-cast view of the natural [N, 2] layout: zero extra HBM
        # traffic.  Grid blocks that overrun `rows_true` are masked in-kernel.
        arr_rows = rows_true
        ragged = covered_rows > rows_true

        def to_view(x):
            return x.reshape(rows_true, ROW_ELEMS)
    else:
        # A pad is unavoidable to form the lane-dense 2-D view; pad straight to
        # the grid coverage so no in-kernel masking is needed (padded rows are
        # zero in both inputs and contribute nothing).
        # TODO(synk): this pad is still one linear XLA copy of each input when
        # N % 128 != 0; removing it would need ragged 1-D blocks, which Mosaic
        # does not lay out well today.
        arr_rows = covered_rows
        ragged = False
        pad = covered_rows * ROW_ELEMS - elems

        def to_view(x):
            return jnp.pad(x.reshape(-1), (0, pad)).reshape(covered_rows, ROW_ELEMS)

    pred_v = to_view(pred_flow)
    gt_v = to_view(gt_flow)

    last_blk = _cdiv(arr_rows, tile_rows) - 1
    in_spec = pl.BlockSpec(
        (tile_rows, ROW_ELEMS),
        lambda p, i: (jnp.minimum(p * steps + i, last_blk), 0))
    out_spec = pl.BlockSpec((1, 1, ROW_ELEMS), lambda p, i: (p, 0, 0))
    part_shape = jax.ShapeDtypeStruct((n_splits, 1, ROW_ELEMS), jnp.float32)

    kernel = _make_kernel(steps, tile_rows, rows_true, ragged)

    maxsq_p, s1_p, s2_p = pl.pallas_call(
        kernel,
        out_shape=(part_shape, part_shape, part_shape),
        grid_spec=pltpu.PrefetchScalarGridSpec(
            num_scalar_prefetch=0,
            grid=(n_splits, steps),
            in_specs=[in_spec, in_spec],
            out_specs=[out_spec, out_spec, out_spec],
            scratch_shapes=[
                pltpu.VMEM((tile_rows, ROW_ELEMS), jnp.float32),
                pltpu.VMEM((tile_rows, ROW_ELEMS), jnp.float32),
                pltpu.VMEM((tile_rows, ROW_ELEMS), jnp.float32),
            ],
        ),
        compiler_params=pltpu.CompilerParams(
            dimension_semantics=("parallel", "arbitrary"),
            vmem_limit_bytes=VMEM_LIMIT_BYTES),
    )(pred_v, gt_v)

    # Tiny epilogue on (n_splits, 1, 256) partials; beta only appears here, so
    # any static beta passed to flow_loss is honored.
    m = jnp.sqrt(jnp.max(maxsq_p))
    s1 = jnp.sum(s1_p)
    s2 = jnp.sum(s2_p)
    denom = m + jnp.float32(EPS)
    beta_f = jnp.float32(beta)
    w_max = 1.0 + beta_f * (m / denom)
    wsum = (s1 + (beta_f / denom) * s2) / w_max
    return (wsum / jnp.float32(n * c)).astype(jnp.float32)


def _flow_loss_ref(pred_flow, gt_flow, beta=9.0):
    """Pure-JAX reference mirroring the PyTorch forward."""
    pred_flow = pred_flow.astype(jnp.float32)
    gt_flow = gt_flow.astype(jnp.float32)
    mag = jnp.linalg.norm(gt_flow, axis=-1)
    w = 1.0 + beta * (mag / (mag.max() + 1e-6))
    w = w / w.max()
    loss = jnp.abs(pred_flow - gt_flow)
    return (w[:, None] * loss).mean()


if __name__ == "__main__":
    key = jax.random.PRNGKey(0)

    def check(n, beta=9.0, zero_gt=False):
        k1, k2 = jax.random.split(jax.random.fold_in(key, n))
        pred = jax.random.normal(k1, (n, 2), dtype=jnp.float32) * 3.0
        gt = (jnp.zeros((n, 2), jnp.float32) if zero_gt
              else jax.random.normal(k2, (n, 2), dtype=jnp.float32) * 3.0)
        out = jax.block_until_ready(flow_loss(pred, gt, beta=beta))
        ref = _flow_loss_ref(pred, gt, beta=beta)
        np.testing.assert_allclose(np.asarray(out), np.asarray(ref),
                                   rtol=1e-4, atol=1e-6)

    check(1000)                    # ragged N -> minimal pad-to-coverage path
    check(1000, beta=4.0)          # beta correctly threaded through the glue
    check(1000, zero_gt=True)      # all-zero gt edge case (M = 0)
    check(2176)                    # zero-copy view + in-kernel row masking
    check(131072)                  # zero-copy view, exact tiling, 2-way split
    check(640000)                  # multi-step accumulation + masked last block

    print("KERNEL_OK")
</pallas_src>

<mosaic_0001>
module attributes {stable_mosaic.version = 11 : i64} {
  func.func @kernel(%arg0: i32, %arg1: i32, %arg2: memref<8x256xf32, #tpu.memory_space<vmem>>, %arg3: memref<8x256xf32, #tpu.memory_space<vmem>>, %arg4: memref<1x1x256xf32, #tpu.memory_space<vmem>>, %arg5: memref<1x1x256xf32, #tpu.memory_space<vmem>>, %arg6: memref<1x1x256xf32, #tpu.memory_space<vmem>>, %arg7: memref<8x256xf32, #tpu.memory_space<vmem>>, %arg8: memref<8x256xf32, #tpu.memory_space<vmem>>, %arg9: memref<8x256xf32, #tpu.memory_space<vmem>>) attributes {dimension_semantics = [#tpu.dimension_semantics<parallel>, #tpu.dimension_semantics<arbitrary>], iteration_bounds = array<i64: 1, 1>, scalar_prefetch = 0 : i64, scratch_operands = 3 : i64, tpu.core_type = #tpu.core_type<tc>, window_params = [{transform_indices = @transform_0, window_bounds = array<i64: 8, 256>}, {transform_indices = @transform_1, window_bounds = array<i64: 8, 256>}, {transform_indices = @transform_2, window_bounds = array<i64: 1, 1, 256>}, {transform_indices = @transform_3, window_bounds = array<i64: 1, 1, 256>}, {transform_indices = @transform_4, window_bounds = array<i64: 1, 1, 256>}]} {
    %c0_i32 = arith.constant 0 : i32
    %0 = arith.cmpi eq, %arg1, %c0_i32 : i32
    %1 = arith.extui %0 : i1 to i32
    %c0_i32_0 = arith.constant 0 : i32
    %2 = arith.cmpi ne, %1, %c0_i32_0 : i32
    scf.if %2 {
      %cst = arith.constant 0.000000e+00 : f32
      %33 = vector.broadcast %cst : f32 to vector<8x256xf32>
      %c0_20 = arith.constant 0 : index
      %c0_21 = arith.constant 0 : index
      %34 = vector.load %arg7[%c0_20, %c0_21] : memref<8x256xf32, #tpu.memory_space<vmem>>, vector<8x256xf32>
      tpu.vector_store %arg7[%c0_20, %c0_21], %33 {strides = array<i32>} : memref<8x256xf32, #tpu.memory_space<vmem>>, vector<8x256xf32>,
      %cst_22 = arith.constant 0.000000e+00 : f32
      %35 = vector.broadcast %cst_22 : f32 to vector<8x256xf32>
      %c0_23 = arith.constant 0 : index
      %c0_24 = arith.constant 0 : index
      %36 = vector.load %arg8[%c0_23, %c0_24] : memref<8x256xf32, #tpu.memory_space<vmem>>, vector<8x256xf32>
      tpu.vector_store %arg8[%c0_23, %c0_24], %35 {strides = array<i32>} : memref<8x256xf32, #tpu.memory_space<vmem>>, vector<8x256xf32>,
      %cst_25 = arith.constant 0.000000e+00 : f32
      %37 = vector.broadcast %cst_25 : f32 to vector<8x256xf32>
      %c0_26 = arith.constant 0 : index
      %c0_27 = arith.constant 0 : index
      %38 = vector.load %arg9[%c0_26, %c0_27] : memref<8x256xf32, #tpu.memory_space<vmem>>, vector<8x256xf32>
      tpu.vector_store %arg9[%c0_26, %c0_27], %37 {strides = array<i32>} : memref<8x256xf32, #tpu.memory_space<vmem>>, vector<8x256xf32>,
    } else {
    }
    %c0 = arith.constant 0 : index
    %c0_1 = arith.constant 0 : index
    %3 = vector.load %arg3[%c0, %c0_1] : memref<8x256xf32, #tpu.memory_space<vmem>>, vector<8x256xf32>
    %c0_2 = arith.constant 0 : index
    %c0_3 = arith.constant 0 : index
    %4 = vector.load %arg2[%c0_2, %c0_3] : memref<8x256xf32, #tpu.memory_space<vmem>>, vector<8x256xf32>
    %5 = arith.subf %4, %3 : vector<8x256xf32>
    %6 = math.absf %5 : vector<8x256xf32>
    %7 = arith.mulf %3, %3 : vector<8x256xf32>
    %8 = tpu.iota {dimensions = array<i32: 1>} : vector<1x256xi32>
    %c1_i32 = arith.constant 1 : i32
    %9 = vector.broadcast %c1_i32 : i32 to vector<1x256xi32>
    %10 = arith.andi %8, %9 : vector<1x256xi32>
    %c0_i32_4 = arith.constant 0 : i32
    %11 = vector.broadcast %c0_i32_4 : i32 to vector<1x256xi32>
    %12 = arith.cmpi eq, %10, %11 : vector<1x256xi32>
    %c255_i32 = arith.constant 255 : i32
    %13 = tpu.dynamic_rotate %7 by %c255_i32 dim 1 : vector<8x256xf32>, i32 -> vector<8x256xf32>
    %c1_i32_5 = arith.constant 1 : i32
    %14 = tpu.dynamic_rotate %7 by %c1_i32_5 dim 1 : vector<8x256xf32>, i32 -> vector<8x256xf32>
    %15 = vector.shape_cast %12 : vector<1x256xi1> to vector<1x256xi1>
    %16 = vector.broadcast %15 : vector<1x256xi1> to vector<8x256xi1>
    %17 = arith.select %16, %13, %14 : vector<8x256xi1>, vector<8x256xf32>
    %18 = arith.addf %7, %17 : vector<8x256xf32>
    %19 = math.sqrt %18 : vector<8x256xf32>
    %c0_6 = arith.constant 0 : index
    %c0_7 = arith.constant 0 : index
    %20 = vector.load %arg7[%c0_6, %c0_7] : memref<8x256xf32, #tpu.memory_space<vmem>>, vector<8x256xf32>
    %21 = arith.maximumf %20, %18 : vector<8x256xf32>
    %c0_8 = arith.constant 0 : index
    %c0_9 = arith.constant 0 : index
    %22 = vector.load %arg7[%c0_8, %c0_9] : memref<8x256xf32, #tpu.memory_space<vmem>>, vector<8x256xf32>
    tpu.vector_store %arg7[%c0_8, %c0_9], %21 {strides = array<i32>} : memref<8x256xf32, #tpu.memory_space<vmem>>, vector<8x256xf32>,
    %c0_10 = arith.constant 0 : index
    %c0_11 = arith.constant 0 : index
    %23 = vector.load %arg8[%c0_10, %c0_11] : memref<8x256xf32, #tpu.memory_space<vmem>>, vector<8x256xf32>
    %24 = arith.addf %23, %6 : vector<8x256xf32>
    %c0_12 = arith.constant 0 : index
    %c0_13 = arith.constant 0 : index
    %25 = vector.load %arg8[%c0_12, %c0_13] : memref<8x256xf32, #tpu.memory_space<vmem>>, vector<8x256xf32>
    tpu.vector_store %arg8[%c0_12, %c0_13], %24 {strides = array<i32>} : memref<8x256xf32, #tpu.memory_space<vmem>>, vector<8x256xf32>,
    %c0_14 = arith.constant 0 : index
    %c0_15 = arith.constant 0 : index
    %26 = vector.load %arg9[%c0_14, %c0_15] : memref<8x256xf32, #tpu.memory_space<vmem>>, vector<8x256xf32>
    %27 = arith.mulf %19, %6 : vector<8x256xf32>
    %28 = arith.addf %26, %27 : vector<8x256xf32>
    %c0_16 = arith.constant 0 : index
    %c0_17 = arith.constant 0 : index
    %29 = vector.load %arg9[%c0_16, %c0_17] : memref<8x256xf32, #tpu.memory_space<vmem>>, vector<8x256xf32>
    tpu.vector_store %arg9[%c0_16, %c0_17], %28 {strides = array<i32>} : memref<8x256xf32, #tpu.memory_space<vmem>>, vector<8x256xf32>,
    %c0_i32_18 = arith.constant 0 : i32
    %30 = arith.cmpi eq, %arg1, %c0_i32_18 : i32
    %31 = arith.extui %30 : i1 to i32
    %c0_i32_19 = arith.constant 0 : i32
    %32 = arith.cmpi ne, %31, %c0_i32_19 : i32
    scf.if %32 {
      %c0_20 = arith.constant 0 : index
      %c0_21 = arith.constant 0 : index
      %33 = vector.load %arg7[%c0_20, %c0_21] : memref<8x256xf32, #tpu.memory_space<vmem>>, vector<8x256xf32>
      %cst = arith.constant dense<0xFF800000> : vector<256xf32>
      %34 = vector.multi_reduction <maximumf>, %33, %cst [0] : vector<8x256xf32> to vector<256xf32>
      %35 = vector.shape_cast %34 : vector<256xf32> to vector<1x256xf32>
      %c0_22 = arith.constant 0 : index
      %c0_23 = arith.constant 0 : index
      %c0_24 = arith.constant 0 : index
      %36 = vector.load %arg4[%c0_22, %c0_23, %c0_24] : memref<1x1x256xf32, #tpu.memory_space<vmem>>, vector<1x1x256xf32>
      %37 = vector.shape_cast %36 : vector<1x1x256xf32> to vector<1x256xf32>
      %38 = vector.shape_cast %35 : vector<1x256xf32> to vector<1x1x256xf32>
      tpu.vector_store %arg4[%c0_22, %c0_23, %c0_24], %38 {strides = array<i32>} : memref<1x1x256xf32, #tpu.memory_space<vmem>>, vector<1x1x256xf32>,
      %c0_25 = arith.constant 0 : index
      %c0_26 = arith.constant 0 : index
      %39 = vector.load %arg8[%c0_25, %c0_26] : memref<8x256xf32, #tpu.memory_space<vmem>>, vector<8x256xf32>
      %cst_27 = arith.constant dense<0.000000e+00> : vector<256xf32>
      %40 = vector.multi_reduction <add>, %39, %cst_27 [0] : vector<8x256xf32> to vector<256xf32>
      %41 = vector.shape_cast %40 : vector<256xf32> to vector<1x256xf32>
      %c0_28 = arith.constant 0 : index
      %c0_29 = arith.constant 0 : index
      %c0_30 = arith.constant 0 : index
      %42 = vector.load %arg5[%c0_28, %c0_29, %c0_30] : memref<1x1x256xf32, #tpu.memory_space<vmem>>, vector<1x1x256xf32>
      %43 = vector.shape_cast %42 : vector<1x1x256xf32> to vector<1x256xf32>
      %44 = vector.shape_cast %41 : vector<1x256xf32> to vector<1x1x256xf32>
      tpu.vector_store %arg5[%c0_28, %c0_29, %c0_30], %44 {strides = array<i32>} : memref<1x1x256xf32, #tpu.memory_space<vmem>>, vector<1x1x256xf32>,
      %c0_31 = arith.constant 0 : index
      %c0_32 = arith.constant 0 : index
      %45 = vector.load %arg9[%c0_31, %c0_32] : memref<8x256xf32, #tpu.memory_space<vmem>>, vector<8x256xf32>
      %cst_33 = arith.constant dense<0.000000e+00> : vector<256xf32>
      %46 = vector.multi_reduction <add>, %45, %cst_33 [0] : vector<8x256xf32> to vector<256xf32>
      %47 = vector.shape_cast %46 : vector<256xf32> to vector<1x256xf32>
      %c0_34 = arith.constant 0 : index
      %c0_35 = arith.constant 0 : index
      %c0_36 = arith.constant 0 : index
      %48 = vector.load %arg6[%c0_34, %c0_35, %c0_36] : memref<1x1x256xf32, #tpu.memory_space<vmem>>, vector<1x1x256xf32>
      %49 = vector.shape_cast %48 : vector<1x1x256xf32> to vector<1x256xf32>
      %50 = vector.shape_cast %47 : vector<1x256xf32> to vector<1x1x256xf32>
      tpu.vector_store %arg6[%c0_34, %c0_35, %c0_36], %50 {strides = array<i32>} : memref<1x1x256xf32, #tpu.memory_space<vmem>>, vector<1x1x256xf32>,
    } else {
    }
    return
  }
  func.func @transform_0(%arg0: i32, %arg1: i32) -> (i32, i32) {
    %c1_i32 = arith.constant 1 : i32
    %0 = arith.muli %arg0, %c1_i32 : i32
    %1 = arith.addi %0, %arg1 : i32
    %c0_i32 = arith.constant 0 : i32
    %2 = arith.minsi %1, %c0_i32 : i32
    %c0_i32_0 = arith.constant 0 : i32
    %c0_i32_1 = arith.constant 0 : i32
    return %2, %c0_i32_0 : i32, i32
  }
  func.func @transform_1(%arg0: i32, %arg1: i32) -> (i32, i32) {
    %c1_i32 = arith.constant 1 : i32
    %0 = arith.muli %arg0, %c1_i32 : i32
    %1 = arith.addi %0, %arg1 : i32
    %c0_i32 = arith.constant 0 : i32
    %2 = arith.minsi %1, %c0_i32 : i32
    %c0_i32_0 = arith.constant 0 : i32
    %c0_i32_1 = arith.constant 0 : i32
    return %2, %c0_i32_0 : i32, i32
  }
  func.func @transform_2(%arg0: i32, %arg1: i32) -> (i32, i32, i32) {
    %c0_i32 = arith.constant 0 : i32
    %c0_i32_0 = arith.constant 0 : i32
    %c0_i32_1 = arith.constant 0 : i32
    return %arg0, %c0_i32, %c0_i32_0 : i32, i32, i32
  }
  func.func @transform_3(%arg0: i32, %arg1: i32) -> (i32, i32, i32) {
    %c0_i32 = arith.constant 0 : i32
    %c0_i32_0 = arith.constant 0 : i32
    %c0_i32_1 = arith.constant 0 : i32
    return %arg0, %c0_i32, %c0_i32_0 : i32, i32, i32
  }
  func.func @transform_4(%arg0: i32, %arg1: i32) -> (i32, i32, i32) {
    %c0_i32 = arith.constant 0 : i32
    %c0_i32_0 = arith.constant 0 : i32
    %c0_i32_1 = arith.constant 0 : i32
    return %arg0, %c0_i32, %c0_i32_0 : i32, i32, i32
  }
}

</mosaic_0001>

<llo_original>
// kernel: flow_loss.1
$region0: #{flow_loss.1}
  #allocation0 [shape = 'u32[]', space=smem, size = 0x4, offset = 0x4, fixed_abs, tag = 'smem constant byte address 0x4 - core index']
  #allocation1 [shape = 'u32[144,128]{1,0:T(1,128)}', space=vmem, size = 0x12000, scoped, tag = 'internal scratch']
  #allocation2 [shape = 'f32[8,256]{1,0:T(8,128)}', space=vmem, size = 0x2000, scoped, tag = 'scratch operand']
  #allocation3 [shape = 'f32[8,256]{1,0:T(8,128)}', space=vmem, size = 0x2000, scoped, tag = 'scratch operand']
  #allocation4 [shape = 'f32[8,256]{1,0:T(8,128)}', space=vmem, size = 0x2000, scoped, tag = 'scratch operand']
  %s0 = inlined_call_operand.vmem [shape: f32[8,256], index: 0, kind: input, shape index: {}]
  %s1 = inlined_call_operand.vmem [shape: f32[8,256], index: 1, kind: input, shape index: {}]
  %s2 = inlined_call_operand.vmem [shape: f32[1,1,256], index: 2, kind: output, shape index: {0}]
  %s3 = inlined_call_operand.vmem [shape: f32[1,1,256], index: 3, kind: output, shape index: {1}]
  %s4 = inlined_call_operand.vmem [shape: f32[1,1,256], index: 4, kind: output, shape index: {2}]
  %5 = xla_tuple %s2, %s3, %s4
  %s6 = sld [smem:[#allocation0]]
  $region42: #{flow_loss.1} parent=0
    _
  %s8 = ssub.s32 1, %s6
  %s9 = scalar_select 0, %s8, %s6
  // Predicated region
  $region2: #{flow_loss.1} parent=0 // pred_check
    _
  $region3: #{flow_loss.1} parent=0 // pred_check_branch
    %11 = sbr.rel (0) target = $region5
  $region4: #{flow_loss.1} parent=0 // pred_region
    %s12 = sadd.s32 0, 0
    %p13 = scmp.lt.s32.totalorder %s12, 0
    %s14 = scalar_select %p13, %s12, 0
    %p15 = scmp.lt.s32.totalorder %s14, 0
    %s16 = scalar_select %p15, %s14, 0
    %s17 = smul.addr %s16, 2
    %s18 = smul.addr %s17, 8
    %s19 = scalar_lea.vmem %s0, %s18
    %s20 = sadd.s32 0, 0
    %p21 = scmp.lt.s32.totalorder %s20, 0
    %s22 = scalar_select %p21, %s20, 0
  $region5: #{flow_loss.1} parent=0 // pred_fallthru
    _
  // Predicated region
  $region6: #{flow_loss.1} parent=0 // pred_check
    _
  $region7: #{flow_loss.1} parent=0 // pred_check_branch
    %24 = sbr.rel (0) target = $region9
  $region8: #{flow_loss.1} parent=0 // pred_region
    %s25 = sadd.s32 0, 0
    %p26 = scmp.lt.s32.totalorder %s25, 0
    %s27 = scalar_select %p26, %s25, 0
    %p28 = scmp.lt.s32.totalorder %s27, 0
    %s29 = scalar_select %p28, %s27, 0
    %s30 = smul.addr %s29, 2
    %s31 = smul.addr %s30, 8
    %s32 = scalar_lea.vmem %s1, %s31
    %s33 = sadd.s32 0, 0
    %p34 = scmp.lt.s32.totalorder %s33, 0
    %s35 = scalar_select %p34, %s33, 0
  $region9: #{flow_loss.1} parent=0 // pred_fallthru
    _
  %s36 = sadd.s32 0, 0
  %p37 = scmp.lt.s32.totalorder %s36, 0
  %s38 = scalar_select %p37, %s36, 0
  %p39 = scmp.lt.s32.totalorder %s38, 0
  %s40 = scalar_select %p39, %s38, 0
  %s41 = smul.addr %s40, 2
  %s42 = smul.addr %s41, 8
  %s43 = scalar_lea.vmem %s0, %s42
  %s44 = sadd.s32 0, 0
  %p45 = scmp.lt.s32.totalorder %s44, 0
  %s46 = scalar_select %p45, %s44, 0
  %p47 = scmp.lt.s32.totalorder %s46, 0
  %s48 = scalar_select %p47, %s46, 0
  %s49 = smul.addr %s48, 2
  %s50 = smul.addr %s49, 8
  %s51 = scalar_lea.vmem %s1, %s50
  %s52 = sadd.s32 0, 0
  %p53 = scmp.lt.s32.totalorder %s52, 0
  %s54 = scalar_select %p53, %s52, 0
  %p55 = scmp.lt.s32.totalorder %s54, 0
  %s56 = scalar_select %p55, %s54, 0
  %s57 = smul.addr %s56, 2
  %s58 = smul.addr %s57, 8
  %s59 = scalar_lea.vmem %s0, %s58
  %s60 = sadd.s32 0, 0
  %p61 = scmp.lt.s32.totalorder %s60, 0
  %s62 = scalar_select %p61, %s60, 0
  %s63 = sadd.s32 0, 0
  %p64 = scmp.lt.s32.totalorder %s63, 0
  %s65 = scalar_select %p64, %s63, 0
  %p66 = scmp.lt.s32.totalorder %s65, 0
  %s67 = scalar_select %p66, %s65, 0
  %s68 = smul.addr %s67, 2
  %s69 = smul.addr %s68, 8
  %s70 = scalar_lea.vmem %s1, %s69
  %s71 = sadd.s32 0, 0
  %p72 = scmp.lt.s32.totalorder %s71, 0
  %s73 = scalar_select %p72, %s71, 0
  %p74 = scmp.eq.s32.totalorder 0, 0
  // Predicated region
  $region10: #{flow_loss.1} parent=0 // pred_check
    %p75 = pneg %p74
  $region11: #{flow_loss.1} parent=0 // pred_check_branch
    %77 = sbr.rel (%p75) target = $region13
  $region12: #{flow_loss.1} parent=0 // pred_region
    %78 = vst [vmem:[#allocation2] sm:$0xff] 0.0
    %79 = vst [vmem:[#allocation2 + $0x8] sm:$0xff] 0.0
    %80 = vst [vmem:[#allocation3] sm:$0xff] 0.0
    %81 = vst [vmem:[#allocation3 + $0x8] sm:$0xff] 0.0
    %82 = vst [vmem:[#allocation4] sm:$0xff] 0.0
    %83 = vst [vmem:[#allocation4 + $0x8] sm:$0xff] 0.0
  $region13: #{flow_loss.1} parent=0 // pred_fallthru
    _
  %v84 = vld [vmem:[%s70] sm:$0xff]
  %v85 = vld [vmem:[%s70 + $0x8] sm:$0xff]
  %v86 = vld [vmem:[%s59] sm:$0xff]
  %v87 = vld [vmem:[%s59 + $0x8] sm:$0xff]
  %v88 = vsub.f32 %v86, %v84
  %v89 = vsub.f32 %v87, %v85
  %v90 = vand.u32 2147483647, %v88
  %v91 = vand.u32 2147483647, %v89
  %v92 = vmul.f32 %v84, %v84
  %v93 = vmul.f32 %v85, %v85
  %v94 = vlaneseq
  %v95 = vand.u32 %v94, 127
  %v96 = vadd.s32 %v95, 128
  %v97 = vand.u32 %v95, 1
  %v98 = vand.u32 %v96, 1
  %vm99 = vcmp.eq.s32.totalorder %v97, 0
  %vm100 = vcmp.eq.s32.totalorder %v98, 0
  %101 = vrot.lane.b32.xlu0 %v92, 127
  %v102 = vpop.permute.xlu0 %101
  %103 = vrot.lane.b32.xlu0 %v93, 127
  %v104 = vpop.permute.xlu0 %103
  %vm105 = vcmp.lt.s32.totalorder %v95, 127
  %v106 = vsel %vm105, %v102, %v104
  %v107 = vsel %vm105, %v104, %v102
  %108 = vrot.lane.b32.xlu0 %v92, 1
  %v109 = vpop.permute.xlu0 %108
  %110 = vrot.lane.b32.xlu0 %v93, 1
  %v111 = vpop.permute.xlu0 %110
  %vm112 = vcmp.lt.s32.totalorder %v95, 1
  %v113 = vsel %vm112, %v109, %v111
  %v114 = vsel %vm112, %v111, %v109
  %v115 = vsel %vm99, 1, 0
  %v116 = vsel %vm100, 1, 0
  %vm117 = vcmp.eq.s32.totalorder %v115, 1
  %vm118 = vcmp.eq.s32.totalorder %v116, 1
  %v119 = vsel %vm117, %v106, %v114
  %v120 = vsel %vm118, %v107, %v113
  %v121 = vadd.f32 %v92, %v119
  %v122 = vadd.f32 %v93, %v120
  %v123 = vrsqrt.pop %v121
  %v124 = vmul.f32 %v121, %v123
  %vm125 = vcmp.eq.f32.partialorder %v121, inf
  %v126 = vsel %vm125, %v121, %v124
  %vm127 = vcmp.eq.f32.partialorder %v121, 0.0
  %v128 = vand.u32 %v121, 2147483648
  %v129 = vsel %vm127, %v128, %v126
  %v130 = vrsqrt.pop %v122
  %v131 = vmul.f32 %v122, %v130
  %vm132 = vcmp.eq.f32.partialorder %v122, inf
  %v133 = vsel %vm132, %v122, %v131
  %vm134 = vcmp.eq.f32.partialorder %v122, 0.0
  %v135 = vand.u32 %v122, 2147483648
  %v136 = vsel %vm134, %v135, %v133
  %v137 = vld [vmem:[#allocation2] sm:$0xff]
  %v138 = vld [vmem:[#allocation2 + $0x8] sm:$0xff]
  %v139 = vmax.f32 %v137, %v121
  %v140 = vmax.f32 %v138, %v122
  %141 = vst [vmem:[#allocation2] sm:$0xff] %v139
  %142 = vst [vmem:[#allocation2 + $0x8] sm:$0xff] %v140
  %v143 = vld [vmem:[#allocation3] sm:$0xff]
  %v144 = vld [vmem:[#allocation3 + $0x8] sm:$0xff]
  %v145 = vadd.f32 %v143, %v90
  %v146 = vadd.f32 %v144, %v91
  %147 = vst [vmem:[#allocation3] sm:$0xff] %v145
  %148 = vst [vmem:[#allocation3 + $0x8] sm:$0xff] %v146
  %v149 = vld [vmem:[#allocation4] sm:$0xff]
  %v150 = vld [vmem:[#allocation4 + $0x8] sm:$0xff]
  %v151 = vmul.f32 %v129, %v90
  %v152 = vmul.f32 %v136, %v91
  %v153 = vadd.f32 %v149, %v151
  %v154 = vadd.f32 %v150, %v152
  %155 = vst [vmem:[#allocation4] sm:$0xff] %v153
  %156 = vst [vmem:[#allocation4 + $0x8] sm:$0xff] %v154
  // Predicated region
  $region14: #{flow_loss.1} parent=0 // pred_check
    %p157 = pneg %p74
  $region15: #{flow_loss.1} parent=0 // pred_check_branch
    %159 = sbr.rel (%p157) target = $region17
  $region16: #{flow_loss.1} parent=0 // pred_region
    %v160 = vld [vmem:[#allocation2] sm:$0xff]
    %v161 = vld [vmem:[#allocation2 + $0x8] sm:$0xff]
    %v162 = vrot.slane %v160, 4
    %v163 = vmax.f32 %v160, %v162
    %v164 = vrot.slane %v163, 2
    %v165 = vmax.f32 %v163, %v164
    %v166 = vrot.slane %v165, 1
    %v167 = vmax.f32 %v165, %v166
    %v168 = vrot.slane %v161, 4
    %v169 = vmax.f32 %v161, %v168
    %v170 = vrot.slane %v169, 2
    %v171 = vmax.f32 %v169, %v170
    %v172 = vrot.slane %v171, 1
    %v173 = vmax.f32 %v171, %v172
    %v176 = vcombine.low %v167, %v173
    %v178 = vunpack.c.l.s4 1966171168
    %v179 = vunpack.c.0.s8 %v178
    %v180 = vlaneseq
    %v181 = vshrl.u32 %v180, 7
    %v182 = vsub.s32 %v179, %v181
    %v183 = vrot.slane %v176, %v182
    %v185 = vunpack.c.l.s4 1966171168
    %v186 = vunpack.c.0.s8 %v185
    %v187 = vlaneseq
    %v188 = vshrl.u32 %v187, 7
    %v189 = vsub.s32 %v186, %v188
    %v190 = vrot.slane %v183, %v189
    %v192 = vlaneseq
    %vm193 = vcmp.ge.s32.totalorder %v192, 0
    %vm194 = vcmp.lt.s32.totalorder %v192, 256
    %vm195 = vmand %vm193, %vm194
    %196 = vst.msk [vmem:[%s2] sm:$0x3] %vm195, %v190
    %v197 = vld [vmem:[#allocation3] sm:$0xff]
    %v198 = vld [vmem:[#allocation3 + $0x8] sm:$0xff]
    %v199 = vrot.slane %v197, 4
    %v200 = vadd.f32 %v197, %v199
    %v201 = vrot.slane %v200, 2
    %v202 = vadd.f32 %v200, %v201
    %v203 = vrot.slane %v202, 1
    %v204 = vadd.f32 %v202, %v203
    %v205 = vrot.slane %v198, 4
    %v206 = vadd.f32 %v198, %v205
    %v207 = vrot.slane %v206, 2
    %v208 = vadd.f32 %v206, %v207
    %v209 = vrot.slane %v208, 1
    %v210 = vadd.f32 %v208, %v209
    %v213 = vcombine.low %v204, %v210
    %v215 = vunpack.c.l.s4 1966171168
    %v216 = vunpack.c.0.s8 %v215
    %v217 = vlaneseq
    %v218 = vshrl.u32 %v217, 7
    %v219 = vsub.s32 %v216, %v218
    %v220 = vrot.slane %v213, %v219
    %v222 = vunpack.c.l.s4 1966171168
    %v223 = vunpack.c.0.s8 %v222
    %v224 = vlaneseq
    %v225 = vshrl.u32 %v224, 7
    %v226 = vsub.s32 %v223, %v225
    %v227 = vrot.slane %v220, %v226
    %229 = vst.msk [vmem:[%s3] sm:$0x3] %vm195, %v227
    %v230 = vld [vmem:[#allocation4] sm:$0xff]
    %v231 = vld [vmem:[#allocation4 + $0x8] sm:$0xff]
    %v232 = vrot.slane %v230, 4
    %v233 = vadd.f32 %v230, %v232
    %v234 = vrot.slane %v233, 2
    %v235 = vadd.f32 %v233, %v234
    %v236 = vrot.slane %v235, 1
    %v237 = vadd.f32 %v235, %v236
    %v238 = vrot.slane %v231, 4
    %v239 = vadd.f32 %v231, %v238
    %v240 = vrot.slane %v239, 2
    %v241 = vadd.f32 %v239, %v240
    %v242 = vrot.slane %v241, 1
    %v243 = vadd.f32 %v241, %v242
    %v246 = vcombine.low %v237, %v243
    %v248 = vunpack.c.l.s4 1966171168
    %v249 = vunpack.c.0.s8 %v248
    %v250 = vlaneseq
    %v251 = vshrl.u32 %v250, 7
    %v252 = vsub.s32 %v249, %v251
    %v253 = vrot.slane %v246, %v252
    %v255 = vunpack.c.l.s4 1966171168
    %v256 = vunpack.c.0.s8 %v255
    %v257 = vlaneseq
    %v258 = vshrl.u32 %v257, 7
    %v259 = vsub.s32 %v256, %v258
    %v260 = vrot.slane %v253, %v259
    %262 = vst.msk [vmem:[%s4] sm:$0x3] %vm195, %v260
  $region17: #{flow_loss.1} parent=0 // pred_fallthru
    _
  // Predicated region
  $region18: #{flow_loss.1} parent=0 // pred_check
    _
  $region19: #{flow_loss.1} parent=0 // pred_check_branch
    %264 = sbr.rel (0) target = $region21
  $region20: #{flow_loss.1} parent=0 // pred_region
    _
  $region21: #{flow_loss.1} parent=0 // pred_fallthru
    _
  // Predicated region
  $region22: #{flow_loss.1} parent=0 // pred_check
    _
  $region23: #{flow_loss.1} parent=0 // pred_check_branch
    %266 = sbr.rel (0) target = $region25
  $region24: #{flow_loss.1} parent=0 // pred_region
    _
  $region25: #{flow_loss.1} parent=0 // pred_fallthru
    _
  // Predicated region
  $region26: #{flow_loss.1} parent=0 // pred_check
    _
  $region27: #{flow_loss.1} parent=0 // pred_check_branch
    %268 = sbr.rel (0) target = $region29
  $region28: #{flow_loss.1} parent=0 // pred_region
    _
  $region29: #{flow_loss.1} parent=0 // pred_fallthru
    _
  // Predicated region
  $region30: #{flow_loss.1} parent=0 // pred_check
    _
  $region31: #{flow_loss.1} parent=0 // pred_check_branch
    %270 = sbr.rel (0) target = $region33
  $region32: #{flow_loss.1} parent=0 // pred_region
    _
  $region33: #{flow_loss.1} parent=0 // pred_fallthru
    _
  // Predicated region
  $region34: #{flow_loss.1} parent=0 // pred_check
    _
  $region35: #{flow_loss.1} parent=0 // pred_check_branch
    %272 = sbr.rel (0) target = $region37
  $region36: #{flow_loss.1} parent=0 // pred_region
    _
  $region37: #{flow_loss.1} parent=0 // pred_fallthru
    _
  // Predicated region
  $region38: #{flow_loss.1} parent=0 // pred_check
    _
  $region39: #{flow_loss.1} parent=0 // pred_check_branch
    %274 = sbr.rel (0) target = $region41
  $region40: #{flow_loss.1} parent=0 // pred_region
    _
  $region41: #{flow_loss.1} parent=0 // pred_fallthru
    _

</llo_original>
